<compile_context>
chip_gen: v7x
topology: tpu7x:2x2x1
jax: 0.10.0
libtpu: 0.0.40
codegen_flags: <defaults>
</compile_context>

<pallas_src>
import jax
import jax.numpy as jnp
from jax.experimental import pallas as pl
from jax.experimental.pallas import tpu as pltpu


def ppi_head_kernel(x_ref, w1_ref, b1_ref, w2_ref, b2_ref, o_ref):
    # Dropout is the identity in eval/inference mode (matches module.eval()).
    # TODO(synk): training-mode dropout (pltpu.stateful_bernoulli) not implemented.
    x = x_ref[...]                                               # [TB, D_in]
    # dense (MXU, f32 accumulation) + bias + tanh in f32.
    h = jnp.dot(x, w1_ref[...], preferred_element_type=jnp.float32)
    h = jnp.tanh(h + b1_ref[...])                                # [TB, H] f32
    # out_proj: [TB,H] x [H,1] rewritten as VPU multiply + cross-lane sum
    # (runs in otherwise-idle VALU/XLU slots instead of a second MXU drain).
    y = jnp.sum(h * w2_ref[...], axis=-1, keepdims=True)         # [TB, 1]
    o_ref[...] = (y + b2_ref[0, 0]).astype(o_ref.dtype)


def ppi_classification_head(features, w1, b1, w2, b2, *,
                            tb=None, matmul_dtype=jnp.bfloat16):
    """features: [B, D_in]; w1: [D_in, H]; b1: [1, H]; w2: [H, 1]; b2: [1, 1].

    matmul_dtype: dtype fed to the MXU for the dense matmul (bf16 default on
    v6e/v7x; pass jnp.float32 for a bit-tight f32 path). All post-matmul math
    (bias, tanh, reduction) stays in f32 — important on v5e (no bf16 VPU/EUP).
    """
    B, D_in = features.shape
    H = w1.shape[1]

    # Normalize parameter shapes/dtypes. H should ideally be a multiple of 128
    # to avoid masked lane vregs (full-dim blocks keep this correct either way).
    b1 = jnp.asarray(b1, jnp.float32).reshape(1, H)
    w2_row = jnp.asarray(w2, jnp.float32).reshape(1, H)          # out_proj weight as a row
    b2 = jnp.asarray(b2, jnp.float32).reshape(1, 1)              # scalar -> SMEM

    x = features.astype(matmul_dtype)
    w1m = w1.astype(matmul_dtype)
    itemsize = jnp.dtype(matmul_dtype).itemsize

    # Batch tile: big enough to amortize the ~0.35 us per-grid-step overhead,
    # small enough that the double-buffered x tiles fit comfortably even in
    # v7x's 64 MiB VMEM (target ~8 MiB for the x stream).
    if tb is None:
        budget = 8 * 1024 * 1024
        tb = max(8, budget // (2 * D_in * itemsize))
    tb = int(min(tb, B))
    if tb < B:
        tb = max(8, (tb // 8) * 8)                               # sublane multiple
    grid = (pl.cdiv(B, tb),)

    # Explicit VMEM limit with headroom (double-buffered x + out, resident params).
    vmem_est = (2 * tb * D_in * itemsize      # x tiles (double-buffered)
                + D_in * H * itemsize         # resident w1
                + 2 * H * 4                   # b1 + w2_row
                + 2 * tb * 4)                 # out tiles (double-buffered)
    vmem_limit = int(min(max(2 * vmem_est + (4 << 20), 16 << 20), 64 << 20))

    return pl.pallas_call(
        ppi_head_kernel,
        out_shape=jax.ShapeDtypeStruct((B, 1), jnp.float32),
        grid=grid,
        in_specs=[
            pl.BlockSpec((tb, D_in), lambda i: (i, 0)),          # streamed x tile
            pl.BlockSpec((D_in, H), lambda i: (0, 0)),           # resident w1
            pl.BlockSpec((1, H), lambda i: (0, 0)),              # resident b1
            pl.BlockSpec((1, H), lambda i: (0, 0)),              # resident w2 row
            pl.BlockSpec(memory_space=pltpu.MemorySpace.SMEM),   # scalar b2
        ],
        out_specs=pl.BlockSpec((tb, 1), lambda i: (i, 0)),
        compiler_params=pltpu.CompilerParams(
            dimension_semantics=("parallel",),
            vmem_limit_bytes=vmem_limit,
        ),
    )(x, w1m, b1, w2_row, b2)


def reference(features, w1, b1, w2, b2):
    h = jnp.tanh(features @ w1 + b1)
    return h @ w2 + b2


if __name__ == "__main__":
    # Small, lane-aligned demo shapes (feature dims multiples of 128 per review).
    B, D_in, H = 64, 128, 128

    key = jax.random.PRNGKey(0)
    k_x, k_w1, k_b1, k_w2, k_b2 = jax.random.split(key, 5)

    features = jax.random.normal(k_x, (B, D_in), dtype=jnp.float32)
    # Deterministic parameter init (synthetic; shapes match the nn.Linear layers).
    w1 = jax.random.normal(k_w1, (D_in, H), dtype=jnp.float32) * 0.05
    b1 = jax.random.normal(k_b1, (1, H), dtype=jnp.float32) * 0.05
    w2 = jax.random.normal(k_w2, (H, 1), dtype=jnp.float32) * 0.05
    b2 = jax.random.normal(k_b2, (1, 1), dtype=jnp.float32) * 0.05

    ref = reference(features, w1, b1, w2, b2)

    # f32 MXU path (tight check). tb=16 -> grid of 4 tiles, exercising the
    # batch pipeline and megacore sharding.
    out_f32 = jax.block_until_ready(
        ppi_classification_head(features, w1, b1, w2, b2,
                                tb=16, matmul_dtype=jnp.float32))
    assert out_f32.shape == (B, 1), out_f32.shape
    assert jnp.allclose(out_f32, ref, atol=1e-5, rtol=1e-5), (out_f32, ref)

    # bf16-input MXU path (default; halves HBM traffic on v6e/v7x) — looser
    # tolerance since the matmul operands are bf16 (accumulation stays f32).
    out_bf16 = jax.block_until_ready(
        ppi_classification_head(features, w1, b1, w2, b2, tb=16))
    assert out_bf16.shape == (B, 1), out_bf16.shape
    assert jnp.allclose(out_bf16, ref, atol=3e-2, rtol=3e-2), (out_bf16, ref)

    print("KERNEL_OK")
</pallas_src>

<mosaic_0001>
module attributes {stable_mosaic.version = 11 : i64} {
  func.func @ppi_head_kernel(%arg0: i32, %arg1: memref<16x128xf32, #tpu.memory_space<vmem>>, %arg2: memref<128x128xf32, #tpu.memory_space<vmem>>, %arg3: memref<1x128xf32, #tpu.memory_space<vmem>>, %arg4: memref<1x128xf32, #tpu.memory_space<vmem>>, %arg5: memref<1x1xf32, #tpu.memory_space<smem>>, %arg6: memref<16x1xf32, #tpu.memory_space<vmem>>) attributes {dimension_semantics = [#tpu.dimension_semantics<parallel>], iteration_bounds = array<i64: 4>, scalar_prefetch = 0 : i64, scratch_operands = 0 : i64, tpu.core_type = #tpu.core_type<tc>, window_params = [{transform_indices = @transform_0, window_bounds = array<i64: 16, 128>}, {pipeline_mode = #tpu.pipeline_mode<synchronous>, transform_indices = @transform_1, window_bounds = array<i64: 128, 128>}, {pipeline_mode = #tpu.pipeline_mode<synchronous>, transform_indices = @transform_2, window_bounds = array<i64: 1, 128>}, {pipeline_mode = #tpu.pipeline_mode<synchronous>, transform_indices = @transform_3, window_bounds = array<i64: 1, 128>}, {transform_indices = @transform_4, window_bounds = array<i64: 1, 1>}, {transform_indices = @transform_5, window_bounds = array<i64: 16, 1>}]} {
    %c0 = arith.constant 0 : index
    %c0_0 = arith.constant 0 : index
    %0 = vector.load %arg1[%c0, %c0_0] : memref<16x128xf32, #tpu.memory_space<vmem>>, vector<16x128xf32>
    %c0_1 = arith.constant 0 : index
    %c0_2 = arith.constant 0 : index
    %1 = vector.load %arg2[%c0_1, %c0_2] : memref<128x128xf32, #tpu.memory_space<vmem>>, vector<128x128xf32>
    %cst = arith.constant dense<0.000000e+00> : vector<16x128xf32>
    %2 = tpu.matmul %0, %1, %cst {dimension_numbers = #tpu.dot_dimension_numbers<[1], [0], [0], [1], [0, 0, 1, 1], [], []>} : vector<16x128xf32>, vector<128x128xf32>, vector<16x128xf32> -> vector<16x128xf32>
    %c0_3 = arith.constant 0 : index
    %c0_4 = arith.constant 0 : index
    %3 = vector.load %arg3[%c0_3, %c0_4] : memref<1x128xf32, #tpu.memory_space<vmem>>, vector<1x128xf32>
    %4 = vector.broadcast %3 : vector<1x128xf32> to vector<16x128xf32>
    %5 = arith.addf %2, %4 : vector<16x128xf32>
    %6 = math.tanh %5 : vector<16x128xf32>
    %c0_5 = arith.constant 0 : index
    %c0_6 = arith.constant 0 : index
    %7 = vector.load %arg4[%c0_5, %c0_6] : memref<1x128xf32, #tpu.memory_space<vmem>>, vector<1x128xf32>
    %8 = vector.broadcast %7 : vector<1x128xf32> to vector<16x128xf32>
    %9 = arith.mulf %6, %8 : vector<16x128xf32>
    %cst_7 = arith.constant dense<0.000000e+00> : vector<16xf32>
    %10 = vector.multi_reduction <add>, %9, %cst_7 [1] : vector<16x128xf32> to vector<16xf32>
    %11 = vector.shape_cast %10 : vector<16xf32> to vector<16x1xf32>
    %c0_8 = arith.constant 0 : index
    %c0_9 = arith.constant 0 : index
    %12 = memref.load %arg5[%c0_8, %c0_9] : memref<1x1xf32, #tpu.memory_space<smem>>
    %13 = vector.broadcast %12 : f32 to vector<16x1xf32>
    %14 = arith.addf %11, %13 : vector<16x1xf32>
    %c0_10 = arith.constant 0 : index
    %c0_11 = arith.constant 0 : index
    %15 = vector.load %arg6[%c0_10, %c0_11] : memref<16x1xf32, #tpu.memory_space<vmem>>, vector<16x1xf32>
    tpu.vector_store %arg6[%c0_10, %c0_11], %14 {strides = array<i32>} : memref<16x1xf32, #tpu.memory_space<vmem>>, vector<16x1xf32>,
    return
  }
  func.func @transform_0(%arg0: i32) -> (i32, i32) {
    %c0_i32 = arith.constant 0 : i32
    %c0_i32_0 = arith.constant 0 : i32
    return %arg0, %c0_i32 : i32, i32
  }
  func.func @transform_1(%arg0: i32) -> (i32, i32) {
    %c0_i32 = arith.constant 0 : i32
    %c0_i32_0 = arith.constant 0 : i32
    %c0_i32_1 = arith.constant 0 : i32
    return %c0_i32, %c0_i32_0 : i32, i32
  }
  func.func @transform_2(%arg0: i32) -> (i32, i32) {
    %c0_i32 = arith.constant 0 : i32
    %c0_i32_0 = arith.constant 0 : i32
    %c0_i32_1 = arith.constant 0 : i32
    return %c0_i32, %c0_i32_0 : i32, i32
  }
  func.func @transform_3(%arg0: i32) -> (i32, i32) {
    %c0_i32 = arith.constant 0 : i32
    %c0_i32_0 = arith.constant 0 : i32
    %c0_i32_1 = arith.constant 0 : i32
    return %c0_i32, %c0_i32_0 : i32, i32
  }
  func.func @transform_4(%arg0: i32) -> (i32, i32) {
    %c0_i32 = arith.constant 0 : i32
    %c0_i32_0 = arith.constant 0 : i32
    %c0_i32_1 = arith.constant 0 : i32
    return %c0_i32, %c0_i32_0 : i32, i32
  }
  func.func @transform_5(%arg0: i32) -> (i32, i32) {
    %c0_i32 = arith.constant 0 : i32
    %c0_i32_0 = arith.constant 0 : i32
    return %arg0, %c0_i32 : i32, i32
  }
}

</mosaic_0001>

<llo_original>
// kernel: tpu_custom_call.1
$region0: #{tpu_custom_call.1}
  #allocation0 [shape = 'u32[]', space=smem, size = 0x4, offset = 0x4, fixed_abs, tag = 'smem constant byte address 0x4 - core index']
  #allocation1 [shape = 'u32[144,128]{1,0:T(1,128)}', space=vmem, size = 0x12000, scoped, tag = 'internal scratch']
  #allocation2 [shape = 'f32[1,1]{1,0:T(1,128)S(6)}', space=smem, size = 0x200, scoped, tag = 'scoped memory for tpu_custom_call.1']
  %s0 = inlined_call_operand.hbm [shape: f32[64,128], index: 0, kind: input, shape index: {}]
  %s1 = inlined_call_operand.hbm [shape: f32[128,128], index: 1, kind: input, shape index: {}]
  %s2 = inlined_call_operand.vmem [shape: f32[1,128], index: 2, kind: input, shape index: {}]
  %s3 = inlined_call_operand.vmem [shape: f32[1,128], index: 3, kind: input, shape index: {}]
  %s4 = inlined_call_operand.<no memory space> [shape: f32[1,1], index: 4, kind: input, shape index: {}]
  %s5 = inlined_call_operand.vmem [shape: f32[64,1], index: 5, kind: output, shape index: {}]
  %s6 = sld [smem:[#allocation0]]
  $region61: #{tpu_custom_call.1} parent=0
    _
  %s8 = ssub.s32 1, %s6
  %s9 = scalar_select 0, %s8, %s6
  %10 = sst [smem:[#allocation2]] %s4
  $region1: #{tpu_custom_call.1} parent=0
    #allocation3 [shape = 'u8[16384]{0}', space=vmem, size = 0x4000, scoped, tag = 'input window, operand 0']
    #allocation4 [shape = 's32[2]{0}', space=sflag, size = 0x8, scoped, tag = 'scoped memory for tpu_custom_call.1']
    #allocation5 [shape = 'u8[65536]{0}', space=vmem, size = 0x10000, scoped, tag = 'input window, operand 1, single buffered']
    #allocation6 [shape = 's32[1]{0}', space=sflag, size = 0x4, scoped, tag = 'scoped memory for tpu_custom_call.1']
    %11 = vsyncpa [#allocation4], 0
    %s12 = scalar_lea.sflag [#allocation4], 1
    %13 = vsyncpa %s12, 0
    %14 = vsyncpa [#allocation6], 0
    loop: start=0, step=1, limit=6
    $region2: #{tpu_custom_call.1} parent=1 // loop_pre_header
      _
    $region3: #{tpu_custom_call.1} parent=1 // loop_header
      %s16 = sphi 0, %s20
      %p17 = scmp.ge.s32.totalorder %s16, 6
      %s26 = sphi 0, %s28
      %s29 = sphi 0, %s26
      %s30 = sphi 0, %s29
      %s46 = sphi 0, %s30
      %s50 = sphi 0, %s50
      %s52 = sphi 0, %s50
      %s53 = sphi 0, %s52
      %s67 = sphi 0, %s53
      %s71 = sphi 0, %s71
      %s73 = sphi 0, %s71
      %s74 = sphi 0, %s73
      %s88 = sphi 0, %s74
      %s92 = sphi 0, %s92
      %s94 = sphi 0, %s92
      %s95 = sphi 0, %s94
      %s109 = sphi 0, %s95
      %s113 = sphi 0, %s113
      %s115 = sphi 0, %s113
      %s116 = sphi 0, %s115
      %s130 = sphi 0, %s116
      %s136 = sphi 0, %s138
      %s139 = sphi 0, %s136
      %s140 = sphi 0, %s139
      %s156 = sphi 0, %s140
    $region4: #{tpu_custom_call.1} parent=1 // loop_header_branch
      %19 = sbr.rel (%p17) target = $region8
    $region5: #{tpu_custom_call.1} parent=1 // loop_body
      %s21 = ssub.s32 %s16, 1
      %s22 = ssub.s32 %s16, 2
      %s23 = sadd.s32 %s16, 1
      %s24 = ssub.s32 %s16, %s23
      %p25 = scmp.eq.s32.totalorder %s24, 0
      %s27 = sadd.s32 %s26, 1
      %s28 = scalar_select %p25, %s26, %s27
      %p31 = pneg %p25
      %p32 = scmp.eq.s32.totalorder %s16, 3
      %p33 = por %p31, %p32
      %p34 = scmp.ne.s32.totalorder %s26, %s29
      %p35 = scmp.eq.s32.totalorder %s16, 0
      %p36 = por %p34, %p35
      %p37 = scmp.ne.s32.totalorder %s26, %s29
      %p38 = scmp.eq.s32.totalorder %s21, 3
      %p39 = por %p37, %p38
      %p40 = scmp.ne.s32.totalorder %s29, %s30
      %p41 = scmp.eq.s32.totalorder %s21, 0
      %p42 = por %p40, %p41
      %p43 = scmp.ne.s32.totalorder %s29, %s30
      %p44 = scmp.eq.s32.totalorder %s22, 3
      %p45 = por %p43, %p44
      %p47 = scmp.ne.s32.totalorder %s30, %s46
      %p48 = scmp.eq.s32.totalorder %s22, 0
      %p49 = por %p47, %p48
      %s51 = sadd.s32 %s50, 1
      %p54 = scmp.eq.s32.totalorder %s16, 3
      %p55 = scmp.ne.s32.totalorder %s50, %s52
      %p56 = scmp.eq.s32.totalorder %s16, 0
      %p57 = por %p55, %p56
      %p58 = scmp.ne.s32.totalorder %s50, %s52
      %p59 = scmp.eq.s32.totalorder %s21, 3
      %p60 = por %p58, %p59
      %p61 = scmp.ne.s32.totalorder %s52, %s53
      %p62 = scmp.eq.s32.totalorder %s21, 0
      %p63 = por %p61, %p62
      %p64 = scmp.ne.s32.totalorder %s52, %s53
      %p65 = scmp.eq.s32.totalorder %s22, 3
      %p66 = por %p64, %p65
      %p68 = scmp.ne.s32.totalorder %s53, %s67
      %p69 = scmp.eq.s32.totalorder %s22, 0
      %p70 = por %p68, %p69
      %s72 = sadd.s32 %s71, 1
      %p75 = scmp.eq.s32.totalorder %s16, 3
      %p76 = scmp.ne.s32.totalorder %s71, %s73
      %p77 = scmp.eq.s32.totalorder %s16, 0
      %p78 = por %p76, %p77
      %p79 = scmp.ne.s32.totalorder %s71, %s73
      %p80 = scmp.eq.s32.totalorder %s21, 3
      %p81 = por %p79, %p80
      %p82 = scmp.ne.s32.totalorder %s73, %s74
      %p83 = scmp.eq.s32.totalorder %s21, 0
      %p84 = por %p82, %p83
      %p85 = scmp.ne.s32.totalorder %s73, %s74
      %p86 = scmp.eq.s32.totalorder %s22, 3
      %p87 = por %p85, %p86
      %p89 = scmp.ne.s32.totalorder %s74, %s88
      %p90 = scmp.eq.s32.totalorder %s22, 0
      %p91 = por %p89, %p90
      %s93 = sadd.s32 %s92, 1
      %p96 = scmp.eq.s32.totalorder %s16, 3
      %p97 = scmp.ne.s32.totalorder %s92, %s94
      %p98 = scmp.eq.s32.totalorder %s16, 0
      %p99 = por %p97, %p98
      %p100 = scmp.ne.s32.totalorder %s92, %s94
      %p101 = scmp.eq.s32.totalorder %s21, 3
      %p102 = por %p100, %p101
      %p103 = scmp.ne.s32.totalorder %s94, %s95
      %p104 = scmp.eq.s32.totalorder %s21, 0
      %p105 = por %p103, %p104
      %p106 = scmp.ne.s32.totalorder %s94, %s95
      %p107 = scmp.eq.s32.totalorder %s22, 3
      %p108 = por %p106, %p107
      %p110 = scmp.ne.s32.totalorder %s95, %s109
      %p111 = scmp.eq.s32.totalorder %s22, 0
      %p112 = por %p110, %p111
      %s114 = sadd.s32 %s113, 1
      %p117 = scmp.eq.s32.totalorder %s16, 3
      %p118 = scmp.ne.s32.totalorder %s113, %s115
      %p119 = scmp.eq.s32.totalorder %s16, 0
      %p120 = por %p118, %p119
      %p121 = scmp.ne.s32.totalorder %s113, %s115
      %p122 = scmp.eq.s32.totalorder %s21, 3
      %p123 = por %p121, %p122
      %p124 = scmp.ne.s32.totalorder %s115, %s116
      %p125 = scmp.eq.s32.totalorder %s21, 0
      %p126 = por %p124, %p125
      %p127 = scmp.ne.s32.totalorder %s115, %s116
      %p128 = scmp.eq.s32.totalorder %s22, 3
      %p129 = por %p127, %p128
      %p131 = scmp.ne.s32.totalorder %s116, %s130
      %p132 = scmp.eq.s32.totalorder %s22, 0
      %p133 = por %p131, %p132
      %s134 = ssub.s32 %s16, %s23
      %p135 = scmp.eq.s32.totalorder %s134, 0
      %s137 = sadd.s32 %s136, 1
      %s138 = scalar_select %p135, %s136, %s137
      %p141 = pneg %p135
      %p142 = scmp.eq.s32.totalorder %s16, 3
      %p143 = por %p141, %p142
      %p144 = scmp.ne.s32.totalorder %s136, %s139
      %p145 = scmp.eq.s32.totalorder %s16, 0
      %p146 = por %p144, %p145
      %p147 = scmp.ne.s32.totalorder %s136, %s139
      %p148 = scmp.eq.s32.totalorder %s21, 3
      %p149 = por %p147, %p148
      %p150 = scmp.ne.s32.totalorder %s139, %s140
      %p151 = scmp.eq.s32.totalorder %s21, 0
      %p152 = por %p150, %p151
      %p153 = scmp.ne.s32.totalorder %s139, %s140
      %p154 = scmp.eq.s32.totalorder %s22, 3
      %p155 = por %p153, %p154
      %p157 = scmp.ne.s32.totalorder %s140, %s156
      %p158 = scmp.eq.s32.totalorder %s22, 0
      %p159 = por %p157, %p158
      %p160 = scmp.le.s32.totalorder 1, %s16
      %p161 = scmp.lt.s32.totalorder %s16, 5
      %p162 = pnand %p160, %p161
      %p163 = pneg %p162
      // Predicated region
      $region9: #{tpu_custom_call.1} parent=5 // pred_check
        _
      $region10: #{tpu_custom_call.1} parent=5 // pred_check_branch
        %165 = sbr.rel (%p162) target = $region12
      $region11: #{tpu_custom_call.1} parent=5 // pred_region
        %s166 = ssub.s32 %s16, 1
        // Predicated region
        $region13: #{tpu_custom_call.1} parent=11 // pred_check
          %p167 = pneg %p63
        $region14: #{tpu_custom_call.1} parent=11 // pred_check_branch
          %169 = sbr.rel (%p167) target = $region16
        $region15: #{tpu_custom_call.1} parent=11 // pred_region
          %s171 = ssub.s32 2048, 2048
          %172 = vsyncadd [#allocation6], %s171
          %s173 = sshll.u32 [#allocation5], 4
          %s174 = int_to_ptr.vmem [resolvable:$true] %s173
          %179 = dma.hbm_to_vmem [thread:$0]  %s1, 2048, %s174, [#allocation6], 128, 128, 8
        $region16: #{tpu_custom_call.1} parent=11 // pred_fallthru
          _
        // Predicated region
        $region17: #{tpu_custom_call.1} parent=11 // pred_check
          %p180 = pneg %p84
        $region18: #{tpu_custom_call.1} parent=11 // pred_check_branch
          %182 = sbr.rel (%p180) target = $region20
        $region19: #{tpu_custom_call.1} parent=11 // pred_region
          _
        $region20: #{tpu_custom_call.1} parent=11 // pred_fallthru
          _
        // Predicated region
        $region21: #{tpu_custom_call.1} parent=11 // pred_check
          %p183 = pneg %p105
        $region22: #{tpu_custom_call.1} parent=11 // pred_check_branch
          %185 = sbr.rel (%p183) target = $region24
        $region23: #{tpu_custom_call.1} parent=11 // pred_region
          _
        $region24: #{tpu_custom_call.1} parent=11 // pred_fallthru
          _
        // Predicated region
        $region25: #{tpu_custom_call.1} parent=11 // pred_check
          %p186 = pneg %p126
        $region26: #{tpu_custom_call.1} parent=11 // pred_check_branch
          %188 = sbr.rel (%p186) target = $region28
        $region27: #{tpu_custom_call.1} parent=11 // pred_region
          _
        $region28: #{tpu_custom_call.1} parent=11 // pred_fallthru
          _
      $region12: #{tpu_custom_call.1} parent=5 // pred_fallthru
        _
      %p189 = scmp.lt.s32.totalorder %s16, 4
      // Predicated region
      $region29: #{tpu_custom_call.1} parent=5 // pred_check
        %p190 = pneg %p189
      $region30: #{tpu_custom_call.1} parent=5 // pred_check_branch
        %192 = sbr.rel (%p190) target = $region32
      $region31: #{tpu_custom_call.1} parent=5 // pred_region
        // Predicated region
        $region33: #{tpu_custom_call.1} parent=31 // pred_check
          %p193 = pneg %p36
        $region34: #{tpu_custom_call.1} parent=31 // pred_check_branch
          %195 = sbr.rel (%p193) target = $region36
        $region35: #{tpu_custom_call.1} parent=31 // pred_region
          %s196 = sand.u32 %s26, 1
          %s197 = scalar_lea.sflag [#allocation4], %s196
          %s198 = sand.u32 %s26, 1
          %s199 = smul.addr %s198, 16
          %s200 = scalar_lea.vmem [#allocation3], %s199
          %s201 = smul.u32 2, %s16
          %s203 = ssub.s32 256, 256
          %204 = vsyncadd %s197, %s203
          %s205 = smul.addr %s201, 128
          %s206 = scalar_lea.hbm %s0, %s205
          %s207 = sshll.u32 %s200, 4
          %s208 = int_to_ptr.vmem [resolvable:$true] %s207
          %213 = dma.hbm_to_vmem [thread:$0]  %s206, 256, %s208, %s197, 128, 128, 8
        $region36: #{tpu_custom_call.1} parent=31 // pred_fallthru
          _
      $region32: #{tpu_custom_call.1} parent=5 // pred_fallthru
        _
      %p214 = scmp.le.s32.totalorder 1, %s16
      %p215 = scmp.lt.s32.totalorder %s16, 5
      %p216 = pnand %p214, %p215
      %p217 = pneg %p216
      // Predicated region
      $region37: #{tpu_custom_call.1} parent=5 // pred_check
        _
      $region38: #{tpu_custom_call.1} parent=5 // pred_check_branch
        %219 = sbr.rel (%p216) target = $region40
      $region39: #{tpu_custom_call.1} parent=5 // pred_region
        %s220 = ssub.s32 %s16, 1
        %s221 = sand.u32 %s29, 1
        %s222 = scalar_lea.sflag [#allocation4], %s221
        %s223 = sand.u32 %s29, 1
        %s224 = smul.addr %s223, 16
        %s225 = scalar_lea.vmem [#allocation3], %s224
        // Predicated region
        $region41: #{tpu_custom_call.1} parent=39 // pred_check
          %p226 = pneg %p42
        $region42: #{tpu_custom_call.1} parent=39 // pred_check_branch
          %228 = sbr.rel (%p226) target = $region44
        $region43: #{tpu_custom_call.1} parent=39 // pred_region
          %229 = dma.done %s222, 256
        $region44: #{tpu_custom_call.1} parent=39 // pred_fallthru
          _
        // Predicated region
        $region45: #{tpu_custom_call.1} parent=39 // pred_check
          %p230 = pneg %p63
        $region46: #{tpu_custom_call.1} parent=39 // pred_check_branch
          %232 = sbr.rel (%p230) target = $region48
        $region47: #{tpu_custom_call.1} parent=39 // pred_region
          %233 = dma.done [#allocation6], 2048
        $region48: #{tpu_custom_call.1} parent=39 // pred_fallthru
          _
        %s234 = sand.u32 %s29, 1
        %s235 = scalar_lea.sflag [#allocation4], %s234
        %s236 = sand.u32 %s29, 1
        %s237 = smul.addr %s236, 16
        %s238 = scalar_lea.vmem [#allocation3], %s237
        %p239 = pneg %p42
        %p240 = pneg %p39
        %p241 = pneg %p63
        %p242 = pneg %p60
        %p243 = pneg %p84
        %p244 = pneg %p81
        %p245 = pneg %p105
        %p246 = pneg %p102
        %p247 = pneg %p126
        %p248 = pneg %p123
        %p249 = pneg %p152
        %p250 = pneg %p149
        %s251 = smul.u32 2, %s21
        %p252 = scmp.lt.s32.totalorder %s251, 7
        %s253 = scalar_select %p252, %s251, 7
        %s254 = smul.addr %s253, 8
        %s255 = scalar_lea.vmem %s5, %s254
        %s256 = smul.u32 2, %s21
        %s257 = smul.u32 2, %s21
        %p258 = scmp.lt.s32.totalorder %s257, 7
        %s259 = scalar_select %p258, %s257, 7
        %s260 = smul.addr %s259, 8
        %s261 = scalar_lea.vmem %s5, %s260
        %s262 = smul.u32 2, %s21
        %v263 = vld [vmem:[%s225] sm:$0xff]
        %v264 = vld [vmem:[%s225 + $0x8] sm:$0xff]
        %v265 = vld [vmem:[#allocation5] sm:$0xff]
        %v266 = vld [vmem:[#allocation5 + $0x8] sm:$0xff]
        %v267 = vld [vmem:[#allocation5 + $0x10] sm:$0xff]
        %v268 = vld [vmem:[#allocation5 + $0x18] sm:$0xff]
        %v269 = vld [vmem:[#allocation5 + $0x20] sm:$0xff]
        %v270 = vld [vmem:[#allocation5 + $0x28] sm:$0xff]
        %v271 = vld [vmem:[#allocation5 + $0x30] sm:$0xff]
        %v272 = vld [vmem:[#allocation5 + $0x38] sm:$0xff]
        %v273 = vld [vmem:[#allocation5 + $0x40] sm:$0xff]
        %v274 = vld [vmem:[#allocation5 + $0x48] sm:$0xff]
        %v275 = vld [vmem:[#allocation5 + $0x50] sm:$0xff]
        %v276 = vld [vmem:[#allocation5 + $0x58] sm:$0xff]
        %v277 = vld [vmem:[#allocation5 + $0x60] sm:$0xff]
        %v278 = vld [vmem:[#allocation5 + $0x68] sm:$0xff]
        %v279 = vld [vmem:[#allocation5 + $0x70] sm:$0xff]
        %v280 = vld [vmem:[#allocation5 + $0x78] sm:$0xff]
        %v281 = vld [vmem:[%s2] sm:$0x1]
        %v283 = vlaneseq
        %v284 = vshrl.u32 %v283, 7
        %v285 = vsub.s32 0, %v284
        %v286 = vrot.slane %v281, %v285
        %288 = vmatprep.subr.mxu0 0.0
        %289 = vmatpush1.msra.mxu0 %v265
        %290 = vmatprep.subr.mxu0 0.0
        %291 = vmatpush1.msra.mxu0 %v266
        %292 = vmatprep.subr.mxu0 0.0
        %293 = vmatpush1.msra.mxu0 %v267
        %294 = vmatprep.subr.mxu0 0.0
        %295 = vmatpush1.msra.mxu0 %v268
        %296 = vmatprep.subr.mxu0 0.0
        %297 = vmatpush1.msra.mxu0 %v269
        %298 = vmatprep.subr.mxu0 0.0
        %299 = vmatpush1.msra.mxu0 %v270
        %300 = vmatprep.subr.mxu0 0.0
        %301 = vmatpush1.msra.mxu0 %v271
        %302 = vmatprep.subr.mxu0 0.0
        %303 = vmatpush1.msra.mxu0 %v272
        %304 = vmatprep.subr.mxu0 0.0
        %305 = vmatpush1.msra.mxu0 %v273
        %306 = vmatprep.subr.mxu0 0.0
        %307 = vmatpush1.msra.mxu0 %v274
        %308 = vmatprep.subr.mxu0 0.0
        %309 = vmatpush1.msra.mxu0 %v275
        %310 = vmatprep.subr.mxu0 0.0
        %311 = vmatpush1.msra.mxu0 %v276
        %312 = vmatprep.subr.mxu0 0.0
        %313 = vmatpush1.msra.mxu0 %v277
        %314 = vmatprep.subr.mxu0 0.0
        %315 = vmatpush1.msra.mxu0 %v278
        %316 = vmatprep.subr.mxu0 0.0
        %317 = vmatpush1.msra.mxu0 %v279
        %318 = vmatprep.subr.mxu0 0.0
        %319 = vmatpush1.msra.mxu0 %v280
        %320 = vmatprep.subr.mxu0 0.0
        %321 = vmatpush1.msra.mxu0 0.0
        %322 = vmatprep.subr.mxu0 0.0
        %323 = vmatpush1.msra.mxu0 0.0
        %324 = vmatprep.subr.mxu0 0.0
        %325 = vmatpush1.msra.mxu0 0.0
        %326 = vmatprep.subr.mxu0 0.0
        %327 = vmatpush1.msra.mxu0 0.0
        %328 = vmatprep.subr.mxu0 0.0
        %329 = vmatpush1.msra.mxu0 0.0
        %330 = vmatprep.subr.mxu0 0.0
        %331 = vmatpush1.msra.mxu0 0.0
        %332 = vmatprep.subr.mxu0 0.0
        %333 = vmatpush1.msra.mxu0 0.0
        %334 = vmatprep.subr.mxu0 0.0
        %335 = vmatpush1.msra.mxu0 0.0
        %336 = vmatprep.subr.mxu0 0.0
        %337 = vmatpush1.msra.mxu0 0.0
        %338 = vmatprep.subr.mxu0 0.0
        %339 = vmatpush1.msra.mxu0 0.0
        %340 = vmatprep.subr.mxu0 0.0
        %341 = vmatpush1.msra.mxu0 0.0
        %342 = vmatprep.subr.mxu0 0.0
        %343 = vmatpush1.msra.mxu0 0.0
        %344 = vmatprep.subr.mxu0 0.0
        %345 = vmatpush1.msra.mxu0 0.0
        %346 = vmatprep.subr.mxu0 0.0
        %347 = vmatpush1.msra.mxu0 0.0
        %348 = vmatprep.subr.mxu0 0.0
        %349 = vmatpush1.msra.mxu0 0.0
        %350 = vmatprep.subr.mxu0 0.0
        %351 = vmatpush1.msra.mxu0 0.0
        %352 = vmatprep.mubr.f32.mxu0 0.0
        %353 = vmatmul.mubr.f32.gmra.mrb[0].mxu0 %v263
        %v354 = vpop.f32.mrb[0].mxu0
        %v355 = vadd.f32 %v286, %v354
        %v356 = vpop.f32.mrb[0].mxu0
        %357 = vmatprep.mubr.f32.mxu0 0.0
        %358 = vmatmul.mubr.f32.gmra.mrb[0].mxu0 %v264
        %v359 = vpop.f32.mrb[0].mxu0
        %v360 = vadd.f32 %v286, %v359
        %v361 = vpop.f32.mrb[0].mxu0
        %362 = vdwg.mxu0
        %v363 = vtanh.pop %v355
        %v364 = vtanh.pop %v360
        %v365 = vld [vmem:[%s3] sm:$0x1]
        %v367 = vlaneseq
        %v368 = vshrl.u32 %v367, 7
        %v369 = vsub.s32 0, %v368
        %v370 = vrot.slane %v365, %v369
        %v372 = vmul.f32 %v363, %v370
        %v373 = vmul.f32 %v364, %v370
        %374 = vadd.xlane.f32.xlu0 %v372
        %v375 = vpop.xlane.xlu0 %374
        %376 = vadd.xlane.f32.xlu0 %v373
        %v377 = vpop.xlane.xlu0 %376
        %s378 = sld [smem:[#allocation2]]
        %v379 = vstv %s378
        %v380 = vadd.f32 %v375, %v379
        %v381 = vadd.f32 %v377, %v379
        %vm382 = vcmask 7168
        %383 = vst.msk [vmem:[%s261] sm:$0xff] %vm382, %v380
        %384 = vst.msk [vmem:[%s261 + $0x8] sm:$0xff] %vm382, %v381
        %s385 = smul.u32 2, %s21
        %p386 = scmp.lt.s32.totalorder %s385, 7
        %s387 = scalar_select %p386, %s385, 7
        %s388 = smul.addr %s387, 8
        %s389 = scalar_lea.vmem %s5, %s388
        // Predicated region
        $region49: #{tpu_custom_call.1} parent=39 // pred_check
          %p390 = pneg %p149
        $region50: #{tpu_custom_call.1} parent=39 // pred_check_branch
          %392 = sbr.rel (%p390) target = $region52
        $region51: #{tpu_custom_call.1} parent=39 // pred_region
          %s393 = smul.u32 2, %s21
        $region52: #{tpu_custom_call.1} parent=39 // pred_fallthru
          _
      $region40: #{tpu_custom_call.1} parent=5 // pred_fallthru
        _
      %p394 = scmp.le.s32.totalorder 2, %s16
      // Predicated region
      $region53: #{tpu_custom_call.1} parent=5 // pred_check
        %p395 = pneg %p394
      $region54: #{tpu_custom_call.1} parent=5 // pred_check_branch
        %397 = sbr.rel (%p395) target = $region56
      $region55: #{tpu_custom_call.1} parent=5 // pred_region
        %s398 = ssub.s32 %s16, 2
        // Predicated region
        $region57: #{tpu_custom_call.1} parent=55 // pred_check
          %p399 = pneg %p155
        $region58: #{tpu_custom_call.1} parent=55 // pred_check_branch
          %401 = sbr.rel (%p399) target = $region60
        $region59: #{tpu_custom_call.1} parent=55 // pred_region
          %s402 = smul.u32 2, %s22
          %p403 = scmp.lt.s32.totalorder %s402, 7
          %s404 = scalar_select %p403, %s402, 7
          %s405 = smul.addr %s404, 8
          %s406 = scalar_lea.vmem %s5, %s405
        $region60: #{tpu_custom_call.1} parent=55 // pred_fallthru
          _
      $region56: #{tpu_custom_call.1} parent=5 // pred_fallthru
        _
    $region6: #{tpu_custom_call.1} parent=1 // loop_footer
      %s20 = sadd.s32 1, %s16
    $region7: #{tpu_custom_call.1} parent=1 // loop_footer_branch
      %15 = sbr.rel target = $region3
    $region8: #{tpu_custom_call.1} parent=1 // loop_exit
      _
    %407 = vsyncpa [#allocation4], 1
    %s408 = scalar_lea.sflag [#allocation4], 1
    %409 = vsyncpa %s408, 1
    %410 = vsyncpa [#allocation6], 1

</llo_original>
